<compile_context>
chip_gen: v7x
topology: tpu7x:2x2x1
jax: 0.10.0
libtpu: 0.0.40
codegen_flags: <defaults>
</compile_context>

<pallas_src>
import functools

import jax
import jax.numpy as jnp
from jax import lax
from jax.experimental import pallas as pl
from jax.experimental.pallas import tpu as pltpu

LANE = 128


def _round_up(v, m):
    return (v + m - 1) // m * m


# ----------------------------- Fused Pallas kernel ----------------------------
def fused_gat_encoder_kernel(x_ref, adj_ref, w_ref, vec_ref, out_ref, *,
                             layer_num, hidden, last_activation,
                             negative_slope=0.2):
    """layer_num x (GATConv(heads=1) + BN(eval) + ReLU), fused; one graph per grid step."""
    h_in = x_ref[0]                                   # (N, HP) f32, lane-dense padded features
    for i in range(layer_num):
        w = w_ref[i]                                  # (HP, HP) bf16; col `hidden` = W @ a_dst^T
        a_src    = vec_ref[4 * i + 0:4 * i + 1, :]    # (1, HP) f32
        bias     = vec_ref[4 * i + 1:4 * i + 2, :]
        bn_scale = vec_ref[4 * i + 2:4 * i + 3, :]
        bn_shift = vec_ref[4 * i + 3:4 * i + 4, :]

        # Feature transform + folded alpha_dst projection: one bf16 MXU pass, f32 accumulate.
        h = jnp.dot(h_in.astype(jnp.bfloat16), w,
                    preferred_element_type=jnp.float32)                  # (N, HP)

        # attention logits: e[i, j] = <h_i, a_dst> + <h_j, a_src>  (edge j -> i)
        alpha_dst = h[:, hidden:hidden + 1]                              # (N, 1) folded column
        alpha_src = lax.dot_general(a_src, h, (((1,), (1,)), ((), ())),
                                    preferred_element_type=jnp.float32)  # (1, N)
        e = alpha_dst + alpha_src                                        # (N, N) broadcast add
        e = jnp.maximum(e, negative_slope * e)                           # LeakyReLU(0.2)
        e = e + adj_ref[0]                                               # bf16 mask bias, upcast per use

        # masked row softmax (masked entries underflow to exactly 0 in f32)
        p = jnp.exp(e - jnp.max(e, axis=-1, keepdims=True))
        inv = pl.reciprocal(jnp.maximum(jnp.sum(p, axis=-1, keepdims=True), 1e-30),
                            approx=True)                                 # EUP slot
        attn = p * inv

        # aggregation on the MXU: bf16 operands, f32 accumulation
        agg = jnp.dot(attn.astype(jnp.bfloat16), h.astype(jnp.bfloat16),
                      preferred_element_type=jnp.float32)                # (N, HP)
        agg = agg + bias                                                 # GATConv bias

        # BatchNorm1d (eval) folded to scale/shift; zero-padded lanes -> exact 0
        y = agg * bn_scale + bn_shift
        if last_activation or i < layer_num - 1:
            y = jnp.maximum(y, 0.0)                                      # ReLU
        # Dropout in eval mode == identity.
        h_in = y

    out_ref[0] = h_in.astype(out_ref.dtype)


# --------------------- Static preprocessing (run once) ------------------------
def pack_gat_params(params, input_dim, hidden, *, bn_eps=1e-5):
    """Pad to lane-dense shapes, fold a_dst into W and BN into scale/shift, stack into 2 arrays."""
    hp = _round_up(max(input_dim, hidden + 1), LANE)   # +1 lane for the folded a_dst column
    w_stack, vec_rows = [], []
    fin = input_dim
    for p in params:
        w_ext = jnp.zeros((hp, hp), jnp.float32)
        w_ext = w_ext.at[:fin, :hidden].set(p["w"])
        w_ext = w_ext.at[:fin, hidden:hidden + 1].set(p["w"] @ p["a_dst"].T)   # fold a_dst
        w_stack.append(w_ext)
        scale = p["gamma"] * lax.rsqrt(p["var"] + bn_eps)                      # fold BN (eval)
        shift = p["beta"] - p["mean"] * scale
        pad = lambda v: jnp.zeros((1, hp), jnp.float32).at[:, :hidden].set(v)
        vec_rows += [pad(p["a_src"]), pad(p["bias"]), pad(scale), pad(shift)]
        fin = hidden
    w_all = jnp.stack(w_stack).astype(jnp.bfloat16)     # (L, HP, HP) -> one DMA
    vec_all = jnp.concatenate(vec_rows, axis=0)         # (4L, HP)   -> one VMEM tile / one DMA
    return w_all, vec_all, hp


def build_adj_bias(adj):
    """0/1 (B, N, N) adjacency (with self loops) -> additive bf16 mask bias (static graphs)."""
    return jnp.where(adj > 0, 0.0, -30000.0).astype(jnp.bfloat16)


# --------------------------- Encoder wrapper ----------------------------------
def gat_encoder_forward(x, adj_bias, w_all, vec_all, *, hidden, last_activation=True):
    b, n, fin = x.shape
    layer_num, hp, _ = w_all.shape
    x_p = jnp.pad(x, ((0, 0), (0, 0), (0, hp - fin)))   # lane-dense input

    kernel = functools.partial(fused_gat_encoder_kernel, layer_num=layer_num,
                               hidden=hidden, last_activation=last_activation)
    out = pl.pallas_call(
        kernel,
        out_shape=jax.ShapeDtypeStruct((b, n, hp), jnp.float32),
        grid=(b,),
        in_specs=[
            pl.BlockSpec((1, n, hp), lambda g: (g, 0, 0)),             # x        (per graph)
            pl.BlockSpec((1, n, n), lambda g: (g, 0, 0)),              # adj bias (per graph)
            pl.BlockSpec((layer_num, hp, hp), lambda g: (0, 0, 0)),    # weights  (resident)
            pl.BlockSpec((4 * layer_num, hp), lambda g: (0, 0)),       # vectors  (resident)
        ],
        out_specs=pl.BlockSpec((1, n, hp), lambda g: (g, 0, 0)),
        compiler_params=pltpu.CompilerParams(
            dimension_semantics=("parallel",),        # v7x: shard graphs across both TensorCores
            vmem_limit_bytes=64 * 1024 * 1024),
    )(x_p, adj_bias, w_all, vec_all)
    return out[:, :, :hidden]


# --------------------------- Pure-JAX reference --------------------------------
def gat_encoder_reference(x, adj, params, *, last_activation=True, bn_eps=1e-5):
    layer_num = len(params)
    h = x
    for i, p in enumerate(params):
        z = h @ p["w"]
        e = (z @ p["a_dst"].T) + (z @ p["a_src"].T).T
        e = jnp.where(e > 0, e, 0.2 * e)
        e = jnp.where(adj > 0, e, -1e30)
        e = e - jnp.max(e, axis=-1, keepdims=True)
        pm = jnp.exp(e)
        attn = pm / jnp.sum(pm, axis=-1, keepdims=True)
        out = attn @ z + p["bias"]
        out = (out - p["mean"]) * lax.rsqrt(p["var"] + bn_eps) * p["gamma"] + p["beta"]
        if not (i == layer_num - 1 and not last_activation):
            out = jnp.maximum(out, 0.0)
        h = out
    return h


# ------------------------------ Param init -------------------------------------
def init_params(key, input_dim, hidden, layer_num):
    params = []
    fin = input_dim
    for _ in range(layer_num):
        key, k1, k2, k3, k4, k5, k6 = jax.random.split(key, 7)
        glorot_w = (6.0 / (fin + hidden)) ** 0.5
        glorot_a = (6.0 / (hidden + 1)) ** 0.5
        params.append(dict(
            w=jax.random.uniform(k1, (fin, hidden), jnp.float32, -glorot_w, glorot_w),
            a_src=jax.random.uniform(k2, (1, hidden), jnp.float32, -glorot_a, glorot_a),
            a_dst=jax.random.uniform(k3, (1, hidden), jnp.float32, -glorot_a, glorot_a),
            bias=jnp.zeros((1, hidden), jnp.float32),
            gamma=1.0 + 0.1 * jax.random.normal(k4, (1, hidden), jnp.float32),
            beta=0.1 * jax.random.normal(k5, (1, hidden), jnp.float32),
            mean=0.1 * jax.random.normal(k6, (1, hidden), jnp.float32),
            var=0.5 + 0.5 * jax.random.uniform(key, (1, hidden), jnp.float32),
        ))
        fin = hidden
    return params


# ---------------------------------- Main ----------------------------------------
if __name__ == "__main__":
    N = 16            # graph nodes (sublane axis)
    INPUT_DIM = 8
    HIDDEN = 32       # logical hidden; padded to 128 lanes inside the wrapper
    LAYER_NUM = 2
    B = 2             # batch of graphs -> "parallel" grid axis

    key = jax.random.PRNGKey(0)
    kx, kp, ka = jax.random.split(key, 3)

    x = jax.random.normal(kx, (B, N, INPUT_DIM), jnp.float32)

    # graph 0: deterministic bidirectional ring; graph 1: deterministic random symmetric graph
    src = jnp.concatenate([jnp.arange(N), (jnp.arange(N) + 1) % N])
    dst = jnp.concatenate([(jnp.arange(N) + 1) % N, jnp.arange(N)])
    adj0 = jnp.zeros((N, N), jnp.float32).at[dst, src].set(1.0)     # adj[i, j] = 1 iff edge j -> i
    rnd = (jax.random.uniform(ka, (N, N)) > 0.7).astype(jnp.float32)
    adj1 = jnp.maximum(rnd, rnd.T)
    eye = jnp.eye(N, dtype=jnp.float32)
    adj = jnp.stack([jnp.maximum(adj0, eye), jnp.maximum(adj1, eye)])  # add_self_loops=True

    params = init_params(kp, INPUT_DIM, HIDDEN, LAYER_NUM)

    # static preprocessing, done ONCE (not per forward call)
    adj_bias = build_adj_bias(adj)
    w_all, vec_all, _ = pack_gat_params(params, INPUT_DIM, HIDDEN)

    out = gat_encoder_forward(x, adj_bias, w_all, vec_all,
                              hidden=HIDDEN, last_activation=True)
    out = jax.block_until_ready(out)
    assert out.shape == (B, N, HIDDEN)

    for g in range(B):
        ref = gat_encoder_reference(x[g], adj[g], params, last_activation=True)
        # bf16 MXU operands (transform + aggregation) and the approx reciprocal compound
        # across the two layers; values are O(1), so validate at 5e-2.
        assert jnp.allclose(out[g], ref, rtol=5e-2, atol=5e-2), f"graph {g}: mismatch vs reference"

    print("KERNEL_OK")
</pallas_src>

<mosaic_0001>
module attributes {stable_mosaic.version = 11 : i64} {
  func.func @fused_gat_encoder_kernel(%arg0: i32, %arg1: memref<1x16x128xf32, #tpu.memory_space<vmem>>, %arg2: memref<1x16x16xbf16, #tpu.memory_space<vmem>>, %arg3: memref<2x128x128xbf16, #tpu.memory_space<vmem>>, %arg4: memref<8x128xf32, #tpu.memory_space<vmem>>, %arg5: memref<1x16x128xf32, #tpu.memory_space<vmem>>) attributes {dimension_semantics = [#tpu.dimension_semantics<parallel>], iteration_bounds = array<i64: 2>, scalar_prefetch = 0 : i64, scratch_operands = 0 : i64, tpu.core_type = #tpu.core_type<tc>, window_params = [{transform_indices = @transform_0, window_bounds = array<i64: 1, 16, 128>}, {transform_indices = @transform_1, window_bounds = array<i64: 1, 16, 16>}, {pipeline_mode = #tpu.pipeline_mode<synchronous>, transform_indices = @transform_2, window_bounds = array<i64: 2, 128, 128>}, {pipeline_mode = #tpu.pipeline_mode<synchronous>, transform_indices = @transform_3, window_bounds = array<i64: 8, 128>}, {transform_indices = @transform_4, window_bounds = array<i64: 1, 16, 128>}]} {
    %c0 = arith.constant 0 : index
    %c0_0 = arith.constant 0 : index
    %c0_1 = arith.constant 0 : index
    %0 = vector.load %arg1[%c0, %c0_0, %c0_1] : memref<1x16x128xf32, #tpu.memory_space<vmem>>, vector<1x16x128xf32>
    %1 = vector.shape_cast %0 : vector<1x16x128xf32> to vector<16x128xf32>
    %c0_2 = arith.constant 0 : index
    %c0_3 = arith.constant 0 : index
    %c0_4 = arith.constant 0 : index
    %2 = vector.load %arg3[%c0_2, %c0_3, %c0_4] : memref<2x128x128xbf16, #tpu.memory_space<vmem>>, vector<1x128x128xbf16>
    %3 = vector.shape_cast %2 : vector<1x128x128xbf16> to vector<128x128xbf16>
    %c0_5 = arith.constant 0 : index
    %c0_6 = arith.constant 0 : index
    %4 = vector.load %arg4[%c0_5, %c0_6] : memref<8x128xf32, #tpu.memory_space<vmem>>, vector<1x128xf32>
    %c1 = arith.constant 1 : index
    %c0_7 = arith.constant 0 : index
    %5 = vector.load %arg4[%c1, %c0_7] : memref<8x128xf32, #tpu.memory_space<vmem>>, vector<1x128xf32>
    %c2 = arith.constant 2 : index
    %c0_8 = arith.constant 0 : index
    %6 = vector.load %arg4[%c2, %c0_8] : memref<8x128xf32, #tpu.memory_space<vmem>>, vector<1x128xf32>
    %c3 = arith.constant 3 : index
    %c0_9 = arith.constant 0 : index
    %7 = vector.load %arg4[%c3, %c0_9] : memref<8x128xf32, #tpu.memory_space<vmem>>, vector<1x128xf32>
    %8 = arith.truncf %1 : vector<16x128xf32> to vector<16x128xbf16>
    %cst = arith.constant dense<0.000000e+00> : vector<16x128xf32>
    %9 = tpu.matmul %8, %3, %cst {dimension_numbers = #tpu.dot_dimension_numbers<[1], [0], [0], [1], [0, 0, 1, 1], [], []>} : vector<16x128xbf16>, vector<128x128xbf16>, vector<16x128xf32> -> vector<16x128xf32>
    %10 = vector.extract_strided_slice %9 {offsets = [0, 32], sizes = [16, 1], strides = [1, 1]} : vector<16x128xf32> to vector<16x1xf32>
    %cst_10 = arith.constant dense<0.000000e+00> : vector<1x16xf32>
    %11 = tpu.matmul %4, %9, %cst_10 {dimension_numbers = #tpu.dot_dimension_numbers<[1], [1], [0], [0], [0, 0, 1, 0], [], []>} : vector<1x128xf32>, vector<16x128xf32>, vector<1x16xf32> -> vector<1x16xf32>
    %12 = vector.broadcast %10 : vector<16x1xf32> to vector<16x16xf32>
    %13 = vector.broadcast %11 : vector<1x16xf32> to vector<16x16xf32>
    %14 = arith.addf %12, %13 : vector<16x16xf32>
    %cst_11 = arith.constant 2.000000e-01 : f32
    %15 = vector.broadcast %cst_11 : f32 to vector<16x16xf32>
    %16 = arith.mulf %15, %14 : vector<16x16xf32>
    %17 = arith.maximumf %14, %16 : vector<16x16xf32>
    %c0_12 = arith.constant 0 : index
    %c0_13 = arith.constant 0 : index
    %c0_14 = arith.constant 0 : index
    %18 = vector.load %arg2[%c0_12, %c0_13, %c0_14] : memref<1x16x16xbf16, #tpu.memory_space<vmem>>, vector<1x16x16xbf16>
    %19 = vector.shape_cast %18 : vector<1x16x16xbf16> to vector<16x16xbf16>
    %20 = arith.extf %19 : vector<16x16xbf16> to vector<16x16xf32>
    %21 = arith.addf %17, %20 : vector<16x16xf32>
    %cst_15 = arith.constant dense<0xFF800000> : vector<16xf32>
    %22 = vector.multi_reduction <maximumf>, %21, %cst_15 [1] : vector<16x16xf32> to vector<16xf32>
    %23 = vector.shape_cast %22 : vector<16xf32> to vector<16x1xf32>
    %24 = vector.broadcast %23 : vector<16x1xf32> to vector<16x16xf32>
    %25 = arith.subf %21, %24 : vector<16x16xf32>
    %26 = math.exp %25 : vector<16x16xf32>
    %cst_16 = arith.constant dense<0.000000e+00> : vector<16xf32>
    %27 = vector.multi_reduction <add>, %26, %cst_16 [1] : vector<16x16xf32> to vector<16xf32>
    %28 = vector.shape_cast %27 : vector<16xf32> to vector<16x1xf32>
    %cst_17 = arith.constant 1.000000e-30 : f32
    %29 = vector.broadcast %cst_17 : f32 to vector<16x1xf32>
    %30 = arith.maximumf %28, %29 : vector<16x1xf32>
    %31 = tpu.reciprocal %30 {approx = true} : vector<16x1xf32> -> vector<16x1xf32>
    %32 = vector.broadcast %31 : vector<16x1xf32> to vector<16x16xf32>
    %33 = arith.mulf %26, %32 : vector<16x16xf32>
    %34 = arith.truncf %33 : vector<16x16xf32> to vector<16x16xbf16>
    %35 = arith.truncf %9 : vector<16x128xf32> to vector<16x128xbf16>
    %cst_18 = arith.constant dense<0.000000e+00> : vector<16x128xf32>
    %36 = tpu.matmul %34, %35, %cst_18 {dimension_numbers = #tpu.dot_dimension_numbers<[1], [0], [0], [1], [0, 0, 1, 1], [], []>} : vector<16x16xbf16>, vector<16x128xbf16>, vector<16x128xf32> -> vector<16x128xf32>
    %37 = vector.broadcast %5 : vector<1x128xf32> to vector<16x128xf32>
    %38 = arith.addf %36, %37 : vector<16x128xf32>
    %39 = vector.broadcast %6 : vector<1x128xf32> to vector<16x128xf32>
    %40 = arith.mulf %38, %39 : vector<16x128xf32>
    %41 = vector.broadcast %7 : vector<1x128xf32> to vector<16x128xf32>
    %42 = arith.addf %40, %41 : vector<16x128xf32>
    %cst_19 = arith.constant 0.000000e+00 : f32
    %43 = vector.broadcast %cst_19 : f32 to vector<16x128xf32>
    %44 = arith.maximumf %42, %43 : vector<16x128xf32>
    %c1_20 = arith.constant 1 : index
    %c0_21 = arith.constant 0 : index
    %c0_22 = arith.constant 0 : index
    %45 = vector.load %arg3[%c1_20, %c0_21, %c0_22] : memref<2x128x128xbf16, #tpu.memory_space<vmem>>, vector<1x128x128xbf16>
    %46 = vector.shape_cast %45 : vector<1x128x128xbf16> to vector<128x128xbf16>
    %c4 = arith.constant 4 : index
    %c0_23 = arith.constant 0 : index
    %47 = vector.load %arg4[%c4, %c0_23] : memref<8x128xf32, #tpu.memory_space<vmem>>, vector<1x128xf32>
    %c5 = arith.constant 5 : index
    %c0_24 = arith.constant 0 : index
    %48 = vector.load %arg4[%c5, %c0_24] : memref<8x128xf32, #tpu.memory_space<vmem>>, vector<1x128xf32>
    %c6 = arith.constant 6 : index
    %c0_25 = arith.constant 0 : index
    %49 = vector.load %arg4[%c6, %c0_25] : memref<8x128xf32, #tpu.memory_space<vmem>>, vector<1x128xf32>
    %c7 = arith.constant 7 : index
    %c0_26 = arith.constant 0 : index
    %50 = vector.load %arg4[%c7, %c0_26] : memref<8x128xf32, #tpu.memory_space<vmem>>, vector<1x128xf32>
    %51 = arith.truncf %44 : vector<16x128xf32> to vector<16x128xbf16>
    %cst_27 = arith.constant dense<0.000000e+00> : vector<16x128xf32>
    %52 = tpu.matmul %51, %46, %cst_27 {dimension_numbers = #tpu.dot_dimension_numbers<[1], [0], [0], [1], [0, 0, 1, 1], [], []>} : vector<16x128xbf16>, vector<128x128xbf16>, vector<16x128xf32> -> vector<16x128xf32>
    %53 = vector.extract_strided_slice %52 {offsets = [0, 32], sizes = [16, 1], strides = [1, 1]} : vector<16x128xf32> to vector<16x1xf32>
    %cst_28 = arith.constant dense<0.000000e+00> : vector<1x16xf32>
    %54 = tpu.matmul %47, %52, %cst_28 {dimension_numbers = #tpu.dot_dimension_numbers<[1], [1], [0], [0], [0, 0, 1, 0], [], []>} : vector<1x128xf32>, vector<16x128xf32>, vector<1x16xf32> -> vector<1x16xf32>
    %55 = vector.broadcast %53 : vector<16x1xf32> to vector<16x16xf32>
    %56 = vector.broadcast %54 : vector<1x16xf32> to vector<16x16xf32>
    %57 = arith.addf %55, %56 : vector<16x16xf32>
    %cst_29 = arith.constant 2.000000e-01 : f32
    %58 = vector.broadcast %cst_29 : f32 to vector<16x16xf32>
    %59 = arith.mulf %58, %57 : vector<16x16xf32>
    %60 = arith.maximumf %57, %59 : vector<16x16xf32>
    %c0_30 = arith.constant 0 : index
    %c0_31 = arith.constant 0 : index
    %c0_32 = arith.constant 0 : index
    %61 = vector.load %arg2[%c0_30, %c0_31, %c0_32] : memref<1x16x16xbf16, #tpu.memory_space<vmem>>, vector<1x16x16xbf16>
    %62 = vector.shape_cast %61 : vector<1x16x16xbf16> to vector<16x16xbf16>
    %63 = arith.extf %62 : vector<16x16xbf16> to vector<16x16xf32>
    %64 = arith.addf %60, %63 : vector<16x16xf32>
    %cst_33 = arith.constant dense<0xFF800000> : vector<16xf32>
    %65 = vector.multi_reduction <maximumf>, %64, %cst_33 [1] : vector<16x16xf32> to vector<16xf32>
    %66 = vector.shape_cast %65 : vector<16xf32> to vector<16x1xf32>
    %67 = vector.broadcast %66 : vector<16x1xf32> to vector<16x16xf32>
    %68 = arith.subf %64, %67 : vector<16x16xf32>
    %69 = math.exp %68 : vector<16x16xf32>
    %cst_34 = arith.constant dense<0.000000e+00> : vector<16xf32>
    %70 = vector.multi_reduction <add>, %69, %cst_34 [1] : vector<16x16xf32> to vector<16xf32>
    %71 = vector.shape_cast %70 : vector<16xf32> to vector<16x1xf32>
    %cst_35 = arith.constant 1.000000e-30 : f32
    %72 = vector.broadcast %cst_35 : f32 to vector<16x1xf32>
    %73 = arith.maximumf %71, %72 : vector<16x1xf32>
    %74 = tpu.reciprocal %73 {approx = true} : vector<16x1xf32> -> vector<16x1xf32>
    %75 = vector.broadcast %74 : vector<16x1xf32> to vector<16x16xf32>
    %76 = arith.mulf %69, %75 : vector<16x16xf32>
    %77 = arith.truncf %76 : vector<16x16xf32> to vector<16x16xbf16>
    %78 = arith.truncf %52 : vector<16x128xf32> to vector<16x128xbf16>
    %cst_36 = arith.constant dense<0.000000e+00> : vector<16x128xf32>
    %79 = tpu.matmul %77, %78, %cst_36 {dimension_numbers = #tpu.dot_dimension_numbers<[1], [0], [0], [1], [0, 0, 1, 1], [], []>} : vector<16x16xbf16>, vector<16x128xbf16>, vector<16x128xf32> -> vector<16x128xf32>
    %80 = vector.broadcast %48 : vector<1x128xf32> to vector<16x128xf32>
    %81 = arith.addf %79, %80 : vector<16x128xf32>
    %82 = vector.broadcast %49 : vector<1x128xf32> to vector<16x128xf32>
    %83 = arith.mulf %81, %82 : vector<16x128xf32>
    %84 = vector.broadcast %50 : vector<1x128xf32> to vector<16x128xf32>
    %85 = arith.addf %83, %84 : vector<16x128xf32>
    %cst_37 = arith.constant 0.000000e+00 : f32
    %86 = vector.broadcast %cst_37 : f32 to vector<16x128xf32>
    %87 = arith.maximumf %85, %86 : vector<16x128xf32>
    %c0_38 = arith.constant 0 : index
    %c0_39 = arith.constant 0 : index
    %c0_40 = arith.constant 0 : index
    %88 = vector.load %arg5[%c0_38, %c0_39, %c0_40] : memref<1x16x128xf32, #tpu.memory_space<vmem>>, vector<1x16x128xf32>
    %89 = vector.shape_cast %88 : vector<1x16x128xf32> to vector<16x128xf32>
    %90 = vector.shape_cast %87 : vector<16x128xf32> to vector<1x16x128xf32>
    tpu.vector_store %arg5[%c0_38, %c0_39, %c0_40], %90 {strides = array<i32>} : memref<1x16x128xf32, #tpu.memory_space<vmem>>, vector<1x16x128xf32>,
    return
  }
  func.func @transform_0(%arg0: i32) -> (i32, i32, i32) {
    %c0_i32 = arith.constant 0 : i32
    %c0_i32_0 = arith.constant 0 : i32
    %c0_i32_1 = arith.constant 0 : i32
    return %arg0, %c0_i32, %c0_i32_0 : i32, i32, i32
  }
  func.func @transform_1(%arg0: i32) -> (i32, i32, i32) {
    %c0_i32 = arith.constant 0 : i32
    %c0_i32_0 = arith.constant 0 : i32
    %c0_i32_1 = arith.constant 0 : i32
    return %arg0, %c0_i32, %c0_i32_0 : i32, i32, i32
  }
  func.func @transform_2(%arg0: i32) -> (i32, i32, i32) {
    %c0_i32 = arith.constant 0 : i32
    %c0_i32_0 = arith.constant 0 : i32
    %c0_i32_1 = arith.constant 0 : i32
    %c0_i32_2 = arith.constant 0 : i32
    return %c0_i32, %c0_i32_0, %c0_i32_1 : i32, i32, i32
  }
  func.func @transform_3(%arg0: i32) -> (i32, i32) {
    %c0_i32 = arith.constant 0 : i32
    %c0_i32_0 = arith.constant 0 : i32
    %c0_i32_1 = arith.constant 0 : i32
    return %c0_i32, %c0_i32_0 : i32, i32
  }
  func.func @transform_4(%arg0: i32) -> (i32, i32, i32) {
    %c0_i32 = arith.constant 0 : i32
    %c0_i32_0 = arith.constant 0 : i32
    %c0_i32_1 = arith.constant 0 : i32
    return %arg0, %c0_i32, %c0_i32_0 : i32, i32, i32
  }
}

</mosaic_0001>

<llo_original>
// kernel: tpu_custom_call.1
$region0: #{tpu_custom_call.1}
  #allocation0 [shape = 'u32[]', space=smem, size = 0x4, offset = 0x4, fixed_abs, tag = 'smem constant byte address 0x4 - core index']
  #allocation1 [shape = 'u32[144,128]{1,0:T(1,128)}', space=vmem, size = 0x12000, scoped, tag = 'internal scratch']
  %s0 = inlined_call_operand.hbm [shape: f32[2,16,128], index: 0, kind: input, shape index: {}]
  %s1 = inlined_call_operand.hbm [shape: bf16[2,16,16], index: 1, kind: input, shape index: {}]
  %s2 = inlined_call_operand.hbm [shape: bf16[2,128,128], index: 2, kind: input, shape index: {}]
  %s3 = inlined_call_operand.hbm [shape: f32[8,128], index: 3, kind: input, shape index: {}]
  %s4 = inlined_call_operand.hbm [shape: f32[2,16,128], index: 4, kind: output, shape index: {}]
  %s5 = sld [smem:[#allocation0]]
  $region65: #{tpu_custom_call.1} parent=0
    _
  %s7 = ssub.s32 1, %s5
  %s8 = scalar_select 0, %s7, %s5
  $region1: #{tpu_custom_call.1} parent=0
    #allocation2 [shape = 'u8[16384]{0}', space=vmem, size = 0x4000, scoped, tag = 'input window, operand 0']
    #allocation3 [shape = 's32[2]{0}', space=sflag, size = 0x8, scoped, tag = 'scoped memory for tpu_custom_call.1']
    #allocation4 [shape = 's32[2]{0}', space=sflag, size = 0x8, scoped, tag = 'scoped memory for tpu_custom_call.1']
    #allocation5 [shape = 'u8[8192]{0}', space=vmem, size = 0x2000, scoped, tag = 'input window, operand 1']
    #allocation6 [shape = 's32[2]{0}', space=sflag, size = 0x8, scoped, tag = 'scoped memory for tpu_custom_call.1']
    #allocation7 [shape = 'u8[65536]{0}', space=vmem, size = 0x10000, scoped, tag = 'input window, operand 2, single buffered']
    #allocation8 [shape = 'u8[4096]{0}', space=vmem, size = 0x1000, scoped, tag = 'input window, operand 3, single buffered']
    #allocation9 [shape = 's32[1]{0}', space=sflag, size = 0x4, scoped, tag = 'scoped memory for tpu_custom_call.1']
    #allocation10 [shape = 'u8[16384]{0}', space=vmem, size = 0x4000, scoped, tag = 'output window, operand 0']
    %9 = vsyncpa [#allocation3], 0
    %s10 = scalar_lea.sflag [#allocation3], 1
    %11 = vsyncpa %s10, 0
    %12 = vsyncpa [#allocation6], 0
    %s13 = scalar_lea.sflag [#allocation6], 1
    %14 = vsyncpa %s13, 0
    %15 = vsyncpa [#allocation9], 0
    %16 = vsyncpa [#allocation4], 0
    %s17 = scalar_lea.sflag [#allocation4], 1
    %18 = vsyncpa %s17, 0
    loop: start=0, step=1, limit=4
    $region2: #{tpu_custom_call.1} parent=1 // loop_pre_header
      _
    $region3: #{tpu_custom_call.1} parent=1 // loop_header
      %s20 = sphi 0, %s24
      %p21 = scmp.ge.s32.totalorder %s20, 4
      %s30 = sphi 0, %s32
      %s33 = sphi 0, %s30
      %s34 = sphi 0, %s33
      %s50 = sphi 0, %s34
      %s56 = sphi 0, %s58
      %s59 = sphi 0, %s56
      %s60 = sphi 0, %s59
      %s76 = sphi 0, %s60
      %s80 = sphi 0, %s80
      %s82 = sphi 0, %s80
      %s83 = sphi 0, %s82
      %s97 = sphi 0, %s83
      %s101 = sphi 0, %s101
      %s103 = sphi 0, %s101
      %s104 = sphi 0, %s103
      %s118 = sphi 0, %s104
      %s124 = sphi 0, %s126
      %s127 = sphi 0, %s124
      %s128 = sphi 0, %s127
      %s144 = sphi 0, %s128
    $region4: #{tpu_custom_call.1} parent=1 // loop_header_branch
      %23 = sbr.rel (%p21) target = $region8
    $region5: #{tpu_custom_call.1} parent=1 // loop_body
      %s25 = ssub.s32 %s20, 1
      %s26 = ssub.s32 %s20, 2
      %s27 = sadd.s32 %s20, 1
      %s28 = ssub.s32 %s20, %s27
      %p29 = scmp.eq.s32.totalorder %s28, 0
      %s31 = sadd.s32 %s30, 1
      %s32 = scalar_select %p29, %s30, %s31
      %p35 = pneg %p29
      %p36 = scmp.eq.s32.totalorder %s20, 1
      %p37 = por %p35, %p36
      %p38 = scmp.ne.s32.totalorder %s30, %s33
      %p39 = scmp.eq.s32.totalorder %s20, 0
      %p40 = por %p38, %p39
      %p41 = scmp.ne.s32.totalorder %s30, %s33
      %p42 = scmp.eq.s32.totalorder %s25, 1
      %p43 = por %p41, %p42
      %p44 = scmp.ne.s32.totalorder %s33, %s34
      %p45 = scmp.eq.s32.totalorder %s25, 0
      %p46 = por %p44, %p45
      %p47 = scmp.ne.s32.totalorder %s33, %s34
      %p48 = scmp.eq.s32.totalorder %s26, 1
      %p49 = por %p47, %p48
      %p51 = scmp.ne.s32.totalorder %s34, %s50
      %p52 = scmp.eq.s32.totalorder %s26, 0
      %p53 = por %p51, %p52
      %s54 = ssub.s32 %s20, %s27
      %p55 = scmp.eq.s32.totalorder %s54, 0
      %s57 = sadd.s32 %s56, 1
      %s58 = scalar_select %p55, %s56, %s57
      %p61 = pneg %p55
      %p62 = scmp.eq.s32.totalorder %s20, 1
      %p63 = por %p61, %p62
      %p64 = scmp.ne.s32.totalorder %s56, %s59
      %p65 = scmp.eq.s32.totalorder %s20, 0
      %p66 = por %p64, %p65
      %p67 = scmp.ne.s32.totalorder %s56, %s59
      %p68 = scmp.eq.s32.totalorder %s25, 1
      %p69 = por %p67, %p68
      %p70 = scmp.ne.s32.totalorder %s59, %s60
      %p71 = scmp.eq.s32.totalorder %s25, 0
      %p72 = por %p70, %p71
      %p73 = scmp.ne.s32.totalorder %s59, %s60
      %p74 = scmp.eq.s32.totalorder %s26, 1
      %p75 = por %p73, %p74
      %p77 = scmp.ne.s32.totalorder %s60, %s76
      %p78 = scmp.eq.s32.totalorder %s26, 0
      %p79 = por %p77, %p78
      %s81 = sadd.s32 %s80, 1
      %p84 = scmp.eq.s32.totalorder %s20, 1
      %p85 = scmp.ne.s32.totalorder %s80, %s82
      %p86 = scmp.eq.s32.totalorder %s20, 0
      %p87 = por %p85, %p86
      %p88 = scmp.ne.s32.totalorder %s80, %s82
      %p89 = scmp.eq.s32.totalorder %s25, 1
      %p90 = por %p88, %p89
      %p91 = scmp.ne.s32.totalorder %s82, %s83
      %p92 = scmp.eq.s32.totalorder %s25, 0
      %p93 = por %p91, %p92
      %p94 = scmp.ne.s32.totalorder %s82, %s83
      %p95 = scmp.eq.s32.totalorder %s26, 1
      %p96 = por %p94, %p95
      %p98 = scmp.ne.s32.totalorder %s83, %s97
      %p99 = scmp.eq.s32.totalorder %s26, 0
      %p100 = por %p98, %p99
      %s102 = sadd.s32 %s101, 1
      %p105 = scmp.eq.s32.totalorder %s20, 1
      %p106 = scmp.ne.s32.totalorder %s101, %s103
      %p107 = scmp.eq.s32.totalorder %s20, 0
      %p108 = por %p106, %p107
      %p109 = scmp.ne.s32.totalorder %s101, %s103
      %p110 = scmp.eq.s32.totalorder %s25, 1
      %p111 = por %p109, %p110
      %p112 = scmp.ne.s32.totalorder %s103, %s104
      %p113 = scmp.eq.s32.totalorder %s25, 0
      %p114 = por %p112, %p113
      %p115 = scmp.ne.s32.totalorder %s103, %s104
      %p116 = scmp.eq.s32.totalorder %s26, 1
      %p117 = por %p115, %p116
      %p119 = scmp.ne.s32.totalorder %s104, %s118
      %p120 = scmp.eq.s32.totalorder %s26, 0
      %p121 = por %p119, %p120
      %s122 = ssub.s32 %s20, %s27
      %p123 = scmp.eq.s32.totalorder %s122, 0
      %s125 = sadd.s32 %s124, 1
      %s126 = scalar_select %p123, %s124, %s125
      %p129 = pneg %p123
      %p130 = scmp.eq.s32.totalorder %s20, 1
      %p131 = por %p129, %p130
      %p132 = scmp.ne.s32.totalorder %s124, %s127
      %p133 = scmp.eq.s32.totalorder %s20, 0
      %p134 = por %p132, %p133
      %p135 = scmp.ne.s32.totalorder %s124, %s127
      %p136 = scmp.eq.s32.totalorder %s25, 1
      %p137 = por %p135, %p136
      %p138 = scmp.ne.s32.totalorder %s127, %s128
      %p139 = scmp.eq.s32.totalorder %s25, 0
      %p140 = por %p138, %p139
      %p141 = scmp.ne.s32.totalorder %s127, %s128
      %p142 = scmp.eq.s32.totalorder %s26, 1
      %p143 = por %p141, %p142
      %p145 = scmp.ne.s32.totalorder %s128, %s144
      %p146 = scmp.eq.s32.totalorder %s26, 0
      %p147 = por %p145, %p146
      %p148 = scmp.le.s32.totalorder 1, %s20
      %p149 = scmp.lt.s32.totalorder %s20, 3
      %p150 = pnand %p148, %p149
      %p151 = pneg %p150
      // Predicated region
      $region9: #{tpu_custom_call.1} parent=5 // pred_check
        _
      $region10: #{tpu_custom_call.1} parent=5 // pred_check_branch
        %153 = sbr.rel (%p150) target = $region12
      $region11: #{tpu_custom_call.1} parent=5 // pred_region
        %s154 = ssub.s32 %s20, 1
        // Predicated region
        $region13: #{tpu_custom_call.1} parent=11 // pred_check
          %p155 = pneg %p93
        $region14: #{tpu_custom_call.1} parent=11 // pred_check_branch
          %157 = sbr.rel (%p155) target = $region16
        $region15: #{tpu_custom_call.1} parent=11 // pred_region
          %s159 = ssub.s32 2048, 2048
          %160 = vsyncadd [#allocation6], %s159
          %s161 = sshll.u32 [#allocation7], 4
          %s162 = int_to_ptr.vmem [resolvable:$true] %s161
          %167 = dma.hbm_to_vmem [thread:$0]  %s2, 2048, %s162, [#allocation6], 64, 64, 4
        $region16: #{tpu_custom_call.1} parent=11 // pred_fallthru
          _
        // Predicated region
        $region17: #{tpu_custom_call.1} parent=11 // pred_check
          %p168 = pneg %p114
        $region18: #{tpu_custom_call.1} parent=11 // pred_check_branch
          %170 = sbr.rel (%p168) target = $region20
        $region19: #{tpu_custom_call.1} parent=11 // pred_region
          %s172 = ssub.s32 128, 128
          %173 = vsyncadd [#allocation9], %s172
          %s175 = sshll.u32 [#allocation8], 4
          %s176 = int_to_ptr.vmem [resolvable:$true] %s175
          %178 = dma.hbm_to_vmem [thread:$0]  %s3, 128, %s176, [#allocation9]
        $region20: #{tpu_custom_call.1} parent=11 // pred_fallthru
          _
      $region12: #{tpu_custom_call.1} parent=5 // pred_fallthru
        _
      %p179 = scmp.lt.s32.totalorder %s20, 2
      // Predicated region
      $region21: #{tpu_custom_call.1} parent=5 // pred_check
        %p180 = pneg %p179
      $region22: #{tpu_custom_call.1} parent=5 // pred_check_branch
        %182 = sbr.rel (%p180) target = $region24
      $region23: #{tpu_custom_call.1} parent=5 // pred_region
        // Predicated region
        $region25: #{tpu_custom_call.1} parent=23 // pred_check
          %p183 = pneg %p40
        $region26: #{tpu_custom_call.1} parent=23 // pred_check_branch
          %185 = sbr.rel (%p183) target = $region28
        $region27: #{tpu_custom_call.1} parent=23 // pred_region
          %s186 = sand.u32 %s30, 1
          %s187 = scalar_lea.sflag [#allocation3], %s186
          %s188 = sand.u32 %s30, 1
          %s189 = smul.addr %s188, 16
          %s190 = scalar_lea.vmem [#allocation2], %s189
          %s192 = ssub.s32 256, 256
          %193 = vsyncadd %s187, %s192
          %s194 = smul.addr %s20, 2
          %s195 = smul.addr %s194, 128
          %s196 = scalar_lea.hbm %s0, %s195
          %s197 = sshll.u32 %s190, 4
          %s198 = int_to_ptr.vmem [resolvable:$true] %s197
          %203 = dma.hbm_to_vmem [thread:$0]  %s196, 256, %s198, %s187, 128, 128, 8
        $region28: #{tpu_custom_call.1} parent=23 // pred_fallthru
          _
        // Predicated region
        $region29: #{tpu_custom_call.1} parent=23 // pred_check
          %p204 = pneg %p66
        $region30: #{tpu_custom_call.1} parent=23 // pred_check_branch
          %206 = sbr.rel (%p204) target = $region32
        $region31: #{tpu_custom_call.1} parent=23 // pred_region
          %s207 = sand.u32 %s20, 1
          %s208 = scalar_lea.sflag [#allocation6], %s207
          %s209 = sand.u32 %s56, 1
          %s210 = smul.addr %s209, 8
          %s211 = scalar_lea.vmem [#allocation5], %s210
          %s213 = ssub.s32 128, 128
          %214 = vsyncadd %s208, %s213
          %s215 = smul.addr %s20, 2
          %s216 = smul.addr %s215, 64
          %s217 = scalar_lea.hbm %s1, %s216
          %s218 = sshll.u32 %s211, 4
          %s219 = int_to_ptr.vmem [resolvable:$true] %s218
          %224 = dma.hbm_to_vmem [thread:$0]  %s217, 128, %s219, %s208, 64, 64, 4
        $region32: #{tpu_custom_call.1} parent=23 // pred_fallthru
          _
      $region24: #{tpu_custom_call.1} parent=5 // pred_fallthru
        _
      %p225 = scmp.le.s32.totalorder 1, %s20
      %p226 = scmp.lt.s32.totalorder %s20, 3
      %p227 = pnand %p225, %p226
      %p228 = pneg %p227
      // Predicated region
      $region33: #{tpu_custom_call.1} parent=5 // pred_check
        _
      $region34: #{tpu_custom_call.1} parent=5 // pred_check_branch
        %230 = sbr.rel (%p227) target = $region36
      $region35: #{tpu_custom_call.1} parent=5 // pred_region
        %s231 = ssub.s32 %s20, 1
        %s232 = sand.u32 %s33, 1
        %s233 = scalar_lea.sflag [#allocation3], %s232
        %s234 = sand.u32 %s33, 1
        %s235 = smul.addr %s234, 16
        %s236 = scalar_lea.vmem [#allocation2], %s235
        // Predicated region
        $region37: #{tpu_custom_call.1} parent=35 // pred_check
          %p237 = pneg %p46
        $region38: #{tpu_custom_call.1} parent=35 // pred_check_branch
          %239 = sbr.rel (%p237) target = $region40
        $region39: #{tpu_custom_call.1} parent=35 // pred_region
          %240 = dma.done %s233, 256
        $region40: #{tpu_custom_call.1} parent=35 // pred_fallthru
          _
        %s241 = sand.u32 %s25, 1
        %s242 = scalar_lea.sflag [#allocation6], %s241
        %s243 = sand.u32 %s59, 1
        %s244 = smul.addr %s243, 8
        %s245 = scalar_lea.vmem [#allocation5], %s244
        // Predicated region
        $region41: #{tpu_custom_call.1} parent=35 // pred_check
          %p246 = pneg %p72
        $region42: #{tpu_custom_call.1} parent=35 // pred_check_branch
          %248 = sbr.rel (%p246) target = $region44
        $region43: #{tpu_custom_call.1} parent=35 // pred_region
          %249 = dma.done %s242, 128
        $region44: #{tpu_custom_call.1} parent=35 // pred_fallthru
          _
        // Predicated region
        $region45: #{tpu_custom_call.1} parent=35 // pred_check
          %p250 = pneg %p93
        $region46: #{tpu_custom_call.1} parent=35 // pred_check_branch
          %252 = sbr.rel (%p250) target = $region48
        $region47: #{tpu_custom_call.1} parent=35 // pred_region
          %253 = dma.done [#allocation6], 2048
        $region48: #{tpu_custom_call.1} parent=35 // pred_fallthru
          _
        // Predicated region
        $region49: #{tpu_custom_call.1} parent=35 // pred_check
          %p254 = pneg %p114
        $region50: #{tpu_custom_call.1} parent=35 // pred_check_branch
          %256 = sbr.rel (%p254) target = $region52
        $region51: #{tpu_custom_call.1} parent=35 // pred_region
          %257 = dma.done [#allocation9], 128
        $region52: #{tpu_custom_call.1} parent=35 // pred_fallthru
          _
        %s258 = sand.u32 %s33, 1
        %s259 = scalar_lea.sflag [#allocation3], %s258
        %s260 = sand.u32 %s33, 1
        %s261 = smul.addr %s260, 16
        %s262 = scalar_lea.vmem [#allocation2], %s261
        %p263 = pneg %p46
        %p264 = pneg %p43
        %s265 = sand.u32 %s25, 1
        %s266 = scalar_lea.sflag [#allocation6], %s265
        %s267 = sand.u32 %s59, 1
        %s268 = smul.addr %s267, 8
        %s269 = scalar_lea.vmem [#allocation5], %s268
        %p270 = pneg %p72
        %p271 = pneg %p69
        %p272 = pneg %p93
        %p273 = pneg %p90
        %p274 = pneg %p114
        %p275 = pneg %p111
        %p276 = pneg %p140
        %p277 = pneg %p137
        %s278 = sand.u32 %s127, 1
        %s279 = scalar_lea.sflag [#allocation4], %s278
        %s280 = sand.u32 %s127, 1
        %s281 = smul.addr %s280, 16
        %s282 = scalar_lea.vmem [#allocation10], %s281
        %v284 = vld [vmem:[%s236] sm:$0xff]
        %v285 = vld [vmem:[%s236 + $0x8] sm:$0xff]
        %v286 = vld [vmem:[#allocation7] sm:$0xf]
        %v287 = vld [vmem:[#allocation7 + $0x4] sm:$0xf]
        %v288 = vld [vmem:[#allocation7 + $0x8] sm:$0xf]
        %v289 = vld [vmem:[#allocation7 + $0xc] sm:$0xf]
        %v290 = vld [vmem:[#allocation7 + $0x10] sm:$0xf]
        %v291 = vld [vmem:[#allocation7 + $0x14] sm:$0xf]
        %v292 = vld [vmem:[#allocation7 + $0x18] sm:$0xf]
        %v293 = vld [vmem:[#allocation7 + $0x1c] sm:$0xf]
        %v294 = vld [vmem:[#allocation7 + $0x20] sm:$0xf]
        %v295 = vld [vmem:[#allocation7 + $0x24] sm:$0xf]
        %v296 = vld [vmem:[#allocation7 + $0x28] sm:$0xf]
        %v297 = vld [vmem:[#allocation7 + $0x2c] sm:$0xf]
        %v298 = vld [vmem:[#allocation7 + $0x30] sm:$0xf]
        %v299 = vld [vmem:[#allocation7 + $0x34] sm:$0xf]
        %v300 = vld [vmem:[#allocation7 + $0x38] sm:$0xf]
        %v301 = vld [vmem:[#allocation7 + $0x3c] sm:$0xf]
        %v302 = vld [vmem:[#allocation8] sm:$0x1]
        %v303 = vld [vmem:[#allocation8 + $0x1] sm:$0x1]
        %v304 = vld [vmem:[#allocation8 + $0x2] sm:$0x1]
        %v305 = vld [vmem:[#allocation8 + $0x3] sm:$0x1]
        %v306 = vpack.c.bf16 %v285, %v284
        %v323 = vunpack.c.l.b16 %v286
        %v324 = vunpack.c.l.b16 %v287
        %v325 = vunpack.c.l.b16 %v288
        %v326 = vunpack.c.l.b16 %v289
        %v327 = vunpack.c.l.b16 %v290
        %v328 = vunpack.c.l.b16 %v291
        %v329 = vunpack.c.l.b16 %v292
        %v330 = vunpack.c.l.b16 %v293
        %v331 = vunpack.c.l.b16 %v294
        %v332 = vunpack.c.l.b16 %v295
        %v333 = vunpack.c.l.b16 %v296
        %v334 = vunpack.c.l.b16 %v297
        %v335 = vunpack.c.l.b16 %v298
        %v336 = vunpack.c.l.b16 %v299
        %v337 = vunpack.c.l.b16 %v300
        %v338 = vunpack.c.l.b16 %v301
        %v339 = vpack.c.b16 %v324, %v323
        %v340 = vpack.c.b16 %v326, %v325
        %v341 = vpack.c.b16 %v328, %v327
        %v342 = vpack.c.b16 %v330, %v329
        %v343 = vpack.c.b16 %v332, %v331
        %v344 = vpack.c.b16 %v334, %v333
        %v345 = vpack.c.b16 %v336, %v335
        %v346 = vpack.c.b16 %v338, %v337
        %355 = vmatprep.subr.bf16.mxu0 0
        %356 = vmatpush1.bf16.msra.mxu0 %v339
        %357 = vmatprep.subr.bf16.mxu0 0
        %358 = vmatpush1.bf16.msra.mxu0 %v340
        %359 = vmatprep.subr.bf16.mxu0 0
        %360 = vmatpush1.bf16.msra.mxu0 %v341
        %361 = vmatprep.subr.bf16.mxu0 0
        %362 = vmatpush1.bf16.msra.mxu0 %v342
        %363 = vmatprep.subr.bf16.mxu0 0
        %364 = vmatpush1.bf16.msra.mxu0 %v343
        %365 = vmatprep.subr.bf16.mxu0 0
        %366 = vmatpush1.bf16.msra.mxu0 %v344
        %367 = vmatprep.subr.bf16.mxu0 0
        %368 = vmatpush1.bf16.msra.mxu0 %v345
        %369 = vmatprep.subr.bf16.mxu0 0
        %370 = vmatpush1.bf16.msra.mxu0 %v346
        %371 = vmatprep.subr.bf16.mxu0 0
        %372 = vmatpush1.bf16.msra.mxu0 0
        %373 = vmatprep.subr.bf16.mxu0 0
        %374 = vmatpush1.bf16.msra.mxu0 0
        %375 = vmatprep.subr.bf16.mxu0 0
        %376 = vmatpush1.bf16.msra.mxu0 0
        %377 = vmatprep.subr.bf16.mxu0 0
        %378 = vmatpush1.bf16.msra.mxu0 0
        %379 = vmatprep.subr.bf16.mxu0 0
        %380 = vmatpush1.bf16.msra.mxu0 0
        %381 = vmatprep.subr.bf16.mxu0 0
        %382 = vmatpush1.bf16.msra.mxu0 0
        %383 = vmatprep.subr.bf16.mxu0 0
        %384 = vmatpush1.bf16.msra.mxu0 0
        %385 = vmatprep.subr.bf16.mxu0 0
        %386 = vmatpush1.bf16.msra.mxu0 0
        %387 = vmatprep.mubr.bf16.mxu0 0
        %388 = vmatmul.mubr.bf16.gmra.mrb[0].mxu0 %v306
        %v389 = vpop.f32.mrb[0].mxu0
        %v390 = vadd.f32 0.0, %v389
        %v391 = vpop.f32.mrb[0].mxu0
        %v392 = vpop.f32.mrb[0].mxu0
        %v393 = vadd.f32 0.0, %v392
        %v394 = vpop.f32.mrb[0].mxu0
        %395 = vdwg.mxu0
        %396 = vmatprep.subr.mxu0 0.0
        %397 = vmatpush1.xpose.msra.mxu0 %v390
        %398 = vmatprep.subr.mxu0 0.0
        %399 = vmatpush1.xpose.msra.mxu0 %v393
        %400 = vmatprep.subr.mxu0 0.0
        %401 = vmatpush1.xpose.msra.mxu0 0.0
        %402 = vmatprep.subr.mxu0 0.0
        %403 = vmatpush1.xpose.msra.mxu0 0.0
        %404 = vmatprep.subr.mxu0 0.0
        %405 = vmatpush1.xpose.msra.mxu0 0.0
        %406 = vmatprep.subr.mxu0 0.0
        %407 = vmatpush1.xpose.msra.mxu0 0.0
        %408 = vmatprep.subr.mxu0 0.0
        %409 = vmatpush1.xpose.msra.mxu0 0.0
        %410 = vmatprep.subr.mxu0 0.0
        %411 = vmatpush1.xpose.msra.mxu0 0.0
        %412 = vmatprep.subr.mxu0 0.0
        %413 = vmatpush1.xpose.msra.mxu0 0.0
        %414 = vmatprep.subr.mxu0 0.0
        %415 = vmatpush1.xpose.msra.mxu0 0.0
        %416 = vmatprep.subr.mxu0 0.0
        %417 = vmatpush1.xpose.msra.mxu0 0.0
        %418 = vmatprep.subr.mxu0 0.0
        %419 = vmatpush1.xpose.msra.mxu0 0.0
        %420 = vmatprep.subr.mxu0 0.0
        %421 = vmatpush1.xpose.msra.mxu0 0.0
        %422 = vmatprep.subr.mxu0 0.0
        %423 = vmatpush1.xpose.msra.mxu0 0.0
        %424 = vmatprep.subr.mxu0 0.0
        %425 = vmatpush1.xpose.msra.mxu0 0.0
        %426 = vmatprep.subr.mxu0 0.0
        %427 = vmatpush1.xpose.msra.mxu0 0.0
        %428 = vmatprep.subr.mxu0 0.0
        %429 = vmatpush1.xpose.msra.mxu0 0.0
        %430 = vmatprep.subr.mxu0 0.0
        %431 = vmatpush1.xpose.msra.mxu0 0.0
        %432 = vmatprep.subr.mxu0 0.0
        %433 = vmatpush1.xpose.msra.mxu0 0.0
        %434 = vmatprep.subr.mxu0 0.0
        %435 = vmatpush1.xpose.msra.mxu0 0.0
        %436 = vmatprep.subr.mxu0 0.0
        %437 = vmatpush1.xpose.msra.mxu0 0.0
        %438 = vmatprep.subr.mxu0 0.0
        %439 = vmatpush1.xpose.msra.mxu0 0.0
        %440 = vmatprep.subr.mxu0 0.0
        %441 = vmatpush1.xpose.msra.mxu0 0.0
        %442 = vmatprep.subr.mxu0 0.0
        %443 = vmatpush1.xpose.msra.mxu0 0.0
        %444 = vmatprep.subr.mxu0 0.0
        %445 = vmatpush1.xpose.msra.mxu0 0.0
        %446 = vmatprep.subr.mxu0 0.0
        %447 = vmatpush1.xpose.msra.mxu0 0.0
        %448 = vmatprep.subr.mxu0 0.0
        %449 = vmatpush1.xpose.msra.mxu0 0.0
        %450 = vmatprep.subr.mxu0 0.0
        %451 = vmatpush1.xpose.msra.mxu0 0.0
        %452 = vmatprep.subr.mxu0 0.0
        %453 = vmatpush1.xpose.msra.mxu0 0.0
        %454 = vmatprep.subr.mxu0 0.0
        %455 = vmatpush1.xpose.msra.mxu0 0.0
        %456 = vmatprep.subr.mxu0 0.0
        %457 = vmatpush1.xpose.msra.mxu0 0.0
        %458 = vmatprep.subr.mxu0 0.0
        %459 = vmatpush1.xpose.msra.mxu0 0.0
        %460 = vmatprep.mubr.f32.mxu0 0.0
        %461 = vmatmul.mubr.f32.gmra.mrb[0].mxu0 %v302
        %v462 = vpop.f32.mrb[0].mxu0
        %v463 = vadd.f32 0.0, %v462
        %v464 = vpop.f32.mrb[0].mxu0
        %465 = vdwg.mxu0
        %467 = vset.pattern.permute.xlu0 32
        %468 = vperm.xlu0 %467, %v390
        %v469 = vpop.permute.xlu0 %468
        %472 = vset.pattern.permute.xlu0 32
        %473 = vperm.xlu0 %472, %v393
        %v474 = vpop.permute.xlu0 %473
        %v476 = vlaneseq
        %v477 = vshrl.u32 %v476, 7
        %v478 = vsub.s32 0, %v477
        %v479 = vrot.slane %v463, %v478
        %v480 = vadd.f32 %v469, %v479
        %v481 = vadd.f32 %v474, %v479
        %v482 = vmul.f32 %v480, 0.2
        %v483 = vmul.f32 %v481, 0.2
        %v484 = vmax.f32 %v480, %v482
        %v485 = vmax.f32 %v481, %v483
        %v486 = vld [vmem:[%s245] sm:$0xf]
        %v487 = vld [vmem:[%s245 + $0x4] sm:$0xf]
        %v488 = vunpack.c.l.bf16 %v486
        %v489 = vunpack.c.l.bf16 %v487
        %v490 = vadd.f32 %v484, %v488
        %v491 = vadd.f32 %v485, %v489
        %vm492 = vcmask 130048
        %v493 = vsel %vm492, %v490, -inf
        %494 = vmax.xlane.f32.xlu0 %v493
        %v495 = vpop.xlane.xlu0 %494
        %v496 = vsel %vm492, %v491, -inf
        %497 = vmax.xlane.f32.xlu0 %v496
        %v498 = vpop.xlane.xlu0 %497
        %v499 = vsub.f32 %v490, %v495
        %v500 = vsub.f32 %v491, %v498
        %v501 = vmul.f32 %v499, 1.442695
        %v502 = vpow.pop %v501
        %v503 = vmul.f32 %v500, 1.442695
        %v504 = vpow.pop %v503
        %v505 = vsel %vm492, %v502, 0.0
        %506 = vadd.xlane.f32.xlu0 %v505
        %v507 = vpop.xlane.xlu0 %506
        %v508 = vsel %vm492, %v504, 0.0
        %509 = vadd.xlane.f32.xlu0 %v508
        %v510 = vpop.xlane.xlu0 %509
        %v511 = vmax.f32 %v507, 1e-30
        %v512 = vmax.f32 %v510, 1e-30
        %v513 = vrcp.pop %v511
        %v514 = vrcp.pop %v512
        %v515 = vmul.f32 %v502, %v513
        %v516 = vmul.f32 %v504, %v514
        %v517 = vpack.c.bf16 %v516, %v515
        %v518 = vpack.c.bf16 %v393, %v390
        %v519 = vlaneseq
        %v520 = vshrl.u32 %v519, 7
        %v521 = vsub.s32 0, %v520
        %v522 = vrot.slane %v303, %v521
        %v524 = vsel %vm492, %v517, 0
        %526 = vmatprep.subr.bf16.mxu0 0
        %527 = vmatpush1.bf16.msra.mxu0 %v518
        %528 = vmatprep.subr.bf16.mxu0 0
        %529 = vmatpush1.bf16.msra.mxu0 0
        %530 = vmatprep.subr.bf16.mxu0 0
        %531 = vmatpush1.bf16.msra.mxu0 0
        %532 = vmatprep.subr.bf16.mxu0 0
        %533 = vmatpush1.bf16.msra.mxu0 0
        %534 = vmatprep.subr.bf16.mxu0 0
        %535 = vmatpush1.bf16.msra.mxu0 0
        %536 = vmatprep.subr.bf16.mxu0 0
        %537 = vmatpush1.bf16.msra.mxu0 0
        %538 = vmatprep.subr.bf16.mxu0 0
        %539 = vmatpush1.bf16.msra.mxu0 0
        %540 = vmatprep.subr.bf16.mxu0 0
        %541 = vmatpush1.bf16.msra.mxu0 0
        %542 = vmatprep.subr.bf16.mxu0 0
        %543 = vmatpush1.bf16.msra.mxu0 0
        %544 = vmatprep.subr.bf16.mxu0 0
        %545 = vmatpush1.bf16.msra.mxu0 0
        %546 = vmatprep.subr.bf16.mxu0 0
        %547 = vmatpush1.bf16.msra.mxu0 0
        %548 = vmatprep.subr.bf16.mxu0 0
        %549 = vmatpush1.bf16.msra.mxu0 0
        %550 = vmatprep.subr.bf16.mxu0 0
        %551 = vmatpush1.bf16.msra.mxu0 0
        %552 = vmatprep.subr.bf16.mxu0 0
        %553 = vmatpush1.bf16.msra.mxu0 0
        %554 = vmatprep.subr.bf16.mxu0 0
        %555 = vmatpush1.bf16.msra.mxu0 0
        %556 = vmatprep.subr.bf16.mxu0 0
        %557 = vmatpush1.bf16.msra.mxu0 0
        %558 = vmatprep.mubr.bf16.mxu0 0
        %559 = vmatmul.mubr.bf16.gmra.mrb[0].mxu0 %v524
        %v560 = vpop.f32.mrb[0].mxu0
        %v561 = vadd.f32 %v522, %v560
        %v562 = vpop.f32.mrb[0].mxu0
        %v563 = vpop.f32.mrb[0].mxu0
        %v564 = vadd.f32 %v522, %v563
        %v565 = vpop.f32.mrb[0].mxu0
        %566 = vdwg.mxu0
        %v567 = vlaneseq
        %v568 = vshrl.u32 %v567, 7
        %v569 = vsub.s32 0, %v568
        %v570 = vrot.slane %v304, %v569
        %v571 = vmul.f32 %v561, %v570
        %v572 = vmul.f32 %v564, %v570
        %v573 = vlaneseq
        %v574 = vshrl.u32 %v573, 7
        %v575 = vsub.s32 0, %v574
        %v576 = vrot.slane %v305, %v575
        %v577 = vadd.f32 %v571, %v576
        %v578 = vadd.f32 %v572, %v576
        %v579 = vmax.f32 %v577, 0.0
        %v580 = vmax.f32 %v578, 0.0
        %s581 = scalar_lea.vmem [#allocation7], 64
        %v582 = vld [vmem:[%s581] sm:$0xf]
        %v583 = vld [vmem:[%s581 + $0x4] sm:$0xf]
        %v584 = vld [vmem:[%s581 + $0x8] sm:$0xf]
        %v585 = vld [vmem:[%s581 + $0xc] sm:$0xf]
        %v586 = vld [vmem:[%s581 + $0x10] sm:$0xf]
        %v587 = vld [vmem:[%s581 + $0x14] sm:$0xf]
        %v588 = vld [vmem:[%s581 + $0x18] sm:$0xf]
        %v589 = vld [vmem:[%s581 + $0x1c] sm:$0xf]
        %v590 = vld [vmem:[%s581 + $0x20] sm:$0xf]
        %v591 = vld [vmem:[%s581 + $0x24] sm:$0xf]
        %v592 = vld [vmem:[%s581 + $0x28] sm:$0xf]
        %v593 = vld [vmem:[%s581 + $0x2c] sm:$0xf]
        %v594 = vld [vmem:[%s581 + $0x30] sm:$0xf]
        %v595 = vld [vmem:[%s581 + $0x34] sm:$0xf]
        %v596 = vld [vmem:[%s581 + $0x38] sm:$0xf]
        %v597 = vld [vmem:[%s581 + $0x3c] sm:$0xf]
        %v598 = vld [vmem:[#allocation8 + $0x4] sm:$0x1]
        %v599 = vld [vmem:[#allocation8 + $0x5] sm:$0x1]
        %v600 = vld [vmem:[#allocation8 + $0x6] sm:$0x1]
        %v601 = vld [vmem:[#allocation8 + $0x7] sm:$0x1]
        %v602 = vpack.c.bf16 %v580, %v579
        %v619 = vunpack.c.l.b16 %v582
        %v620 = vunpack.c.l.b16 %v583
        %v621 = vunpack.c.l.b16 %v584
        %v622 = vunpack.c.l.b16 %v585
        %v623 = vunpack.c.l.b16 %v586
        %v624 = vunpack.c.l.b16 %v587
        %v625 = vunpack.c.l.b16 %v588
        %v626 = vunpack.c.l.b16 %v589
        %v627 = vunpack.c.l.b16 %v590
        %v628 = vunpack.c.l.b16 %v591
        %v629 = vunpack.c.l.b16 %v592
        %v630 = vunpack.c.l.b16 %v593
        %v631 = vunpack.c.l.b16 %v594
        %v632 = vunpack.c.l.b16 %v595
        %v633 = vunpack.c.l.b16 %v596
        %v634 = vunpack.c.l.b16 %v597
        %v635 = vpack.c.b16 %v620, %v619
        %v636 = vpack.c.b16 %v622, %v621
        %v637 = vpack.c.b16 %v624, %v623
        %v638 = vpack.c.b16 %v626, %v625
        %v639 = vpack.c.b16 %v628, %v627
        %v640 = vpack.c.b16 %v630, %v629
        %v641 = vpack.c.b16 %v632, %v631
        %v642 = vpack.c.b16 %v634, %v633
        %651 = vmatprep.subr.bf16.mxu0 0
        %652 = vmatpush1.bf16.msra.mxu0 %v635
        %653 = vmatprep.subr.bf16.mxu0 0
        %654 = vmatpush1.bf16.msra.mxu0 %v636
        %655 = vmatprep.subr.bf16.mxu0 0
        %656 = vmatpush1.bf16.msra.mxu0 %v637
        %657 = vmatprep.subr.bf16.mxu0 0
        %658 = vmatpush1.bf16.msra.mxu0 %v638
        %659 = vmatprep.subr.bf16.mxu0 0
        %660 = vmatpush1.bf16.msra.mxu0 %v639
        %661 = vmatprep.subr.bf16.mxu0 0
        %662 = vmatpush1.bf16.msra.mxu0 %v640
        %663 = vmatprep.subr.bf16.mxu0 0
        %664 = vmatpush1.bf16.msra.mxu0 %v641
        %665 = vmatprep.subr.bf16.mxu0 0
        %666 = vmatpush1.bf16.msra.mxu0 %v642
        %667 = vmatprep.subr.bf16.mxu0 0
        %668 = vmatpush1.bf16.msra.mxu0 0
        %669 = vmatprep.subr.bf16.mxu0 0
        %670 = vmatpush1.bf16.msra.mxu0 0
        %671 = vmatprep.subr.bf16.mxu0 0
        %672 = vmatpush1.bf16.msra.mxu0 0
        %673 = vmatprep.subr.bf16.mxu0 0
        %674 = vmatpush1.bf16.msra.mxu0 0
        %675 = vmatprep.subr.bf16.mxu0 0
        %676 = vmatpush1.bf16.msra.mxu0 0
        %677 = vmatprep.subr.bf16.mxu0 0
        %678 = vmatpush1.bf16.msra.mxu0 0
        %679 = vmatprep.subr.bf16.mxu0 0
        %680 = vmatpush1.bf16.msra.mxu0 0
        %681 = vmatprep.subr.bf16.mxu0 0
        %682 = vmatpush1.bf16.msra.mxu0 0
        %683 = vmatprep.mubr.bf16.mxu0 0
        %684 = vmatmul.mubr.bf16.gmra.mrb[0].mxu0 %v602
        %v685 = vpop.f32.mrb[0].mxu0
        %v686 = vadd.f32 0.0, %v685
        %v687 = vpop.f32.mrb[0].mxu0
        %v688 = vpop.f32.mrb[0].mxu0
        %v689 = vadd.f32 0.0, %v688
        %v690 = vpop.f32.mrb[0].mxu0
        %691 = vdwg.mxu0
        %692 = vmatprep.subr.mxu0 0.0
        %693 = vmatpush1.xpose.msra.mxu0 %v686
        %694 = vmatprep.subr.mxu0 0.0
        %695 = vmatpush1.xpose.msra.mxu0 %v689
        %696 = vmatprep.subr.mxu0 0.0
        %697 = vmatpush1.xpose.msra.mxu0 0.0
        %698 = vmatprep.subr.mxu0 0.0
        %699 = vmatpush1.xpose.msra.mxu0 0.0
        %700 = vmatprep.subr.mxu0 0.0
        %701 = vmatpush1.xpose.msra.mxu0 0.0
        %702 = vmatprep.subr.mxu0 0.0
        %703 = vmatpush1.xpose.msra.mxu0 0.0
        %704 = vmatprep.subr.mxu0 0.0
        %705 = vmatpush1.xpose.msra.mxu0 0.0
        %706 = vmatprep.subr.mxu0 0.0
        %707 = vmatpush1.xpose.msra.mxu0 0.0
        %708 = vmatprep.subr.mxu0 0.0
        %709 = vmatpush1.xpose.msra.mxu0 0.0
        %710 = vmatprep.subr.mxu0 0.0
        %711 = vmatpush1.xpose.msra.mxu0 0.0
        %712 = vmatprep.subr.mxu0 0.0
        %713 = vmatpush1.xpose.msra.mxu0 0.0
        %714 = vmatprep.subr.mxu0 0.0
        %715 = vmatpush1.xpose.msra.mxu0 0.0
        %716 = vmatprep.subr.mxu0 0.0
        %717 = vmatpush1.xpose.msra.mxu0 0.0
        %718 = vmatprep.subr.mxu0 0.0
        %719 = vmatpush1.xpose.msra.mxu0 0.0
        %720 = vmatprep.subr.mxu0 0.0
        %721 = vmatpush1.xpose.msra.mxu0 0.0
        %722 = vmatprep.subr.mxu0 0.0
        %723 = vmatpush1.xpose.msra.mxu0 0.0
        %724 = vmatprep.subr.mxu0 0.0
        %725 = vmatpush1.xpose.msra.mxu0 0.0
        %726 = vmatprep.subr.mxu0 0.0
        %727 = vmatpush1.xpose.msra.mxu0 0.0
        %728 = vmatprep.subr.mxu0 0.0
        %729 = vmatpush1.xpose.msra.mxu0 0.0
        %730 = vmatprep.subr.mxu0 0.0
        %731 = vmatpush1.xpose.msra.mxu0 0.0
        %732 = vmatprep.subr.mxu0 0.0
        %733 = vmatpush1.xpose.msra.mxu0 0.0
        %734 = vmatprep.subr.mxu0 0.0
        %735 = vmatpush1.xpose.msra.mxu0 0.0
        %736 = vmatprep.subr.mxu0 0.0
        %737 = vmatpush1.xpose.msra.mxu0 0.0
        %738 = vmatprep.subr.mxu0 0.0
        %739 = vmatpush1.xpose.msra.mxu0 0.0
        %740 = vmatprep.subr.mxu0 0.0
        %741 = vmatpush1.xpose.msra.mxu0 0.0
        %742 = vmatprep.subr.mxu0 0.0
        %743 = vmatpush1.xpose.msra.mxu0 0.0
        %744 = vmatprep.subr.mxu0 0.0
        %745 = vmatpush1.xpose.msra.mxu0 0.0
        %746 = vmatprep.subr.mxu0 0.0
        %747 = vmatpush1.xpose.msra.mxu0 0.0
        %748 = vmatprep.subr.mxu0 0.0
        %749 = vmatpush1.xpose.msra.mxu0 0.0
        %750 = vmatprep.subr.mxu0 0.0
        %751 = vmatpush1.xpose.msra.mxu0 0.0
        %752 = vmatprep.subr.mxu0 0.0
        %753 = vmatpush1.xpose.msra.mxu0 0.0
        %754 = vmatprep.subr.mxu0 0.0
        %755 = vmatpush1.xpose.msra.mxu0 0.0
        %756 = vmatprep.mubr.f32.mxu0 0.0
        %757 = vmatmul.mubr.f32.gmra.mrb[0].mxu0 %v598
        %v758 = vpop.f32.mrb[0].mxu0
        %v759 = vadd.f32 0.0, %v758
        %v760 = vpop.f32.mrb[0].mxu0
        %761 = vdwg.mxu0
        %763 = vset.pattern.permute.xlu0 32
        %764 = vperm.xlu0 %763, %v686
        %v765 = vpop.permute.xlu0 %764
        %768 = vset.pattern.permute.xlu0 32
        %769 = vperm.xlu0 %768, %v689
        %v770 = vpop.permute.xlu0 %769
        %v772 = vlaneseq
        %v773 = vshrl.u32 %v772, 7
        %v774 = vsub.s32 0, %v773
        %v775 = vrot.slane %v759, %v774
        %v776 = vadd.f32 %v765, %v775
        %v777 = vadd.f32 %v770, %v775
        %v778 = vmul.f32 %v776, 0.2
        %v779 = vmul.f32 %v777, 0.2
        %v780 = vmax.f32 %v776, %v778
        %v781 = vmax.f32 %v777, %v779
        %v782 = vadd.f32 %v780, %v488
        %v783 = vadd.f32 %v781, %v489
        %v784 = vsel %vm492, %v782, -inf
        %785 = vmax.xlane.f32.xlu0 %v784
        %v786 = vpop.xlane.xlu0 %785
        %v787 = vsel %vm492, %v783, -inf
        %788 = vmax.xlane.f32.xlu0 %v787
        %v789 = vpop.xlane.xlu0 %788
        %v790 = vsub.f32 %v782, %v786
        %v791 = vsub.f32 %v783, %v789
        %v792 = vmul.f32 %v790, 1.442695
        %v793 = vpow.pop %v792
        %v794 = vmul.f32 %v791, 1.442695
        %v795 = vpow.pop %v794
        %v796 = vsel %vm492, %v793, 0.0
        %797 = vadd.xlane.f32.xlu0 %v796
        %v798 = vpop.xlane.xlu0 %797
        %v799 = vsel %vm492, %v795, 0.0
        %800 = vadd.xlane.f32.xlu0 %v799
        %v801 = vpop.xlane.xlu0 %800
        %v802 = vmax.f32 %v798, 1e-30
        %v803 = vmax.f32 %v801, 1e-30
        %v804 = vrcp.pop %v802
        %v805 = vrcp.pop %v803
        %v806 = vmul.f32 %v793, %v804
        %v807 = vmul.f32 %v795, %v805
        %v808 = vpack.c.bf16 %v807, %v806
        %v809 = vpack.c.bf16 %v689, %v686
        %v810 = vlaneseq
        %v811 = vshrl.u32 %v810, 7
        %v812 = vsub.s32 0, %v811
        %v813 = vrot.slane %v599, %v812
        %v815 = vsel %vm492, %v808, 0
        %817 = vmatprep.subr.bf16.mxu0 0
        %818 = vmatpush1.bf16.msra.mxu0 %v809
        %819 = vmatprep.subr.bf16.mxu0 0
        %820 = vmatpush1.bf16.msra.mxu0 0
        %821 = vmatprep.subr.bf16.mxu0 0
        %822 = vmatpush1.bf16.msra.mxu0 0
        %823 = vmatprep.subr.bf16.mxu0 0
        %824 = vmatpush1.bf16.msra.mxu0 0
        %825 = vmatprep.subr.bf16.mxu0 0
        %826 = vmatpush1.bf16.msra.mxu0 0
        %827 = vmatprep.subr.bf16.mxu0 0
        %828 = vmatpush1.bf16.msra.mxu0 0
        %829 = vmatprep.subr.bf16.mxu0 0
        %830 = vmatpush1.bf16.msra.mxu0 0
        %831 = vmatprep.subr.bf16.mxu0 0
        %832 = vmatpush1.bf16.msra.mxu0 0
        %833 = vmatprep.subr.bf16.mxu0 0
        %834 = vmatpush1.bf16.msra.mxu0 0
        %835 = vmatprep.subr.bf16.mxu0 0
        %836 = vmatpush1.bf16.msra.mxu0 0
        %837 = vmatprep.subr.bf16.mxu0 0
        %838 = vmatpush1.bf16.msra.mxu0 0
        %839 = vmatprep.subr.bf16.mxu0 0
        %840 = vmatpush1.bf16.msra.mxu0 0
        %841 = vmatprep.subr.bf16.mxu0 0
        %842 = vmatpush1.bf16.msra.mxu0 0
        %843 = vmatprep.subr.bf16.mxu0 0
        %844 = vmatpush1.bf16.msra.mxu0 0
        %845 = vmatprep.subr.bf16.mxu0 0
        %846 = vmatpush1.bf16.msra.mxu0 0
        %847 = vmatprep.subr.bf16.mxu0 0
        %848 = vmatpush1.bf16.msra.mxu0 0
        %849 = vmatprep.mubr.bf16.mxu0 0
        %850 = vmatmul.mubr.bf16.gmra.mrb[0].mxu0 %v815
        %v851 = vpop.f32.mrb[0].mxu0
        %v852 = vadd.f32 %v813, %v851
        %v853 = vpop.f32.mrb[0].mxu0
        %v854 = vpop.f32.mrb[0].mxu0
        %v855 = vadd.f32 %v813, %v854
        %v856 = vpop.f32.mrb[0].mxu0
        %857 = vdwg.mxu0
        %v858 = vlaneseq
        %v859 = vshrl.u32 %v858, 7
        %v860 = vsub.s32 0, %v859
        %v861 = vrot.slane %v600, %v860
        %v862 = vmul.f32 %v852, %v861
        %v863 = vmul.f32 %v855, %v861
        %v864 = vlaneseq
        %v865 = vshrl.u32 %v864, 7
        %v866 = vsub.s32 0, %v865
        %v867 = vrot.slane %v601, %v866
        %v868 = vadd.f32 %v862, %v867
        %v869 = vadd.f32 %v863, %v867
        %v870 = vmax.f32 %v868, 0.0
        %v871 = vmax.f32 %v869, 0.0
        %872 = vst [vmem:[%s282] sm:$0xff] %v870
        %873 = vst [vmem:[%s282 + $0x8] sm:$0xff] %v871
        %s874 = sand.u32 %s127, 1
        %s875 = scalar_lea.sflag [#allocation4], %s874
        %s876 = sand.u32 %s127, 1
        %s877 = smul.addr %s876, 16
        %s878 = scalar_lea.vmem [#allocation10], %s877
        // Predicated region
        $region53: #{tpu_custom_call.1} parent=35 // pred_check
          %p879 = pneg %p137
        $region54: #{tpu_custom_call.1} parent=35 // pred_check_branch
          %881 = sbr.rel (%p879) target = $region56
        $region55: #{tpu_custom_call.1} parent=35 // pred_region
          %s883 = ssub.s32 256, 256
          %884 = vsyncadd %s875, %s883
          %s885 = smul.addr %s25, 2
          %s886 = smul.addr %s885, 128
          %s887 = scalar_lea.hbm %s4, %s886
          %s888 = sshll.u32 %s878, 4
          %s889 = int_to_ptr.vmem [resolvable:$true] %s888
          %894 = dma.vmem_to_hbm [thread:$0]  %s889, 256, %s887, %s875, 128, 128, 8
        $region56: #{tpu_custom_call.1} parent=35 // pred_fallthru
          _
      $region36: #{tpu_custom_call.1} parent=5 // pred_fallthru
        _
      %p895 = scmp.le.s32.totalorder 2, %s20
      // Predicated region
      $region57: #{tpu_custom_call.1} parent=5 // pred_check
        %p896 = pneg %p895
      $region58: #{tpu_custom_call.1} parent=5 // pred_check_branch
        %898 = sbr.rel (%p896) target = $region60
      $region59: #{tpu_custom_call.1} parent=5 // pred_region
        %s899 = ssub.s32 %s20, 2
        // Predicated region
        $region61: #{tpu_custom_call.1} parent=59 // pred_check
          %p900 = pneg %p143
        $region62: #{tpu_custom_call.1} parent=59 // pred_check_branch
          %902 = sbr.rel (%p900) target = $region64
        $region63: #{tpu_custom_call.1} parent=59 // pred_region
          %s903 = sand.u32 %s128, 1
          %s904 = scalar_lea.sflag [#allocation4], %s903
          %s905 = sand.u32 %s128, 1
          %s906 = smul.addr %s905, 16
          %s907 = scalar_lea.vmem [#allocation10], %s906
          %908 = dma.done %s904, 256
        $region64: #{tpu_custom_call.1} parent=59 // pred_fallthru
          _
      $region60: #{tpu_custom_call.1} parent=5 // pred_fallthru
        _
    $region6: #{tpu_custom_call.1} parent=1 // loop_footer
      %s24 = sadd.s32 1, %s20
    $region7: #{tpu_custom_call.1} parent=1 // loop_footer_branch
      %19 = sbr.rel target = $region3
    $region8: #{tpu_custom_call.1} parent=1 // loop_exit
      _
    %909 = vsyncpa [#allocation3], 1
    %s910 = scalar_lea.sflag [#allocation3], 1
    %911 = vsyncpa %s910, 1
    %912 = vsyncpa [#allocation6], 1
    %s913 = scalar_lea.sflag [#allocation6], 1
    %914 = vsyncpa %s913, 1
    %915 = vsyncpa [#allocation9], 1
    %916 = vsyncpa [#allocation4], 1
    %s917 = scalar_lea.sflag [#allocation4], 1
    %918 = vsyncpa %s917, 1

</llo_original>
